<compile_context>
chip_gen: v7x
topology: tpu7x:2x2x1
jax: 0.10.0
libtpu: 0.0.40
codegen_flags: <defaults>
</compile_context>

<pallas_src>
import functools

import jax
import jax.numpy as jnp
from jax.experimental import pallas as pl
from jax.experimental.pallas import tpu as pltpu

EPS = 1e-5
_LANE = 128
_MAX_ROW_TILE = 1024          # beyond ~512-1024 rows gains are marginal
_MIN_GRID_STEPS = 4           # only enforced on 2-TensorCore chips (v7x)


def _sublane_multiple(dtype):
    # fp32 -> 8, bf16/fp16 -> 16, int8/fp8 -> 32 (sub-32-bit packs along sublanes)
    itemsize = jnp.dtype(dtype).itemsize
    return max(8, 32 // max(itemsize, 1))


def _tpu_config():
    """Return (vmem_limit_bytes, tile_budget_bytes, two_tensorcores)."""
    vmem_bytes = None
    try:
        info = pltpu.get_tpu_info()
        vmem_bytes = int(getattr(info, "vmem_capacity_bytes", 0)) or None
    except Exception:
        vmem_bytes = None
    kind = ""
    try:
        kind = jax.devices()[0].device_kind.lower()
    except Exception:
        pass
    two_tc = "v7" in kind
    if vmem_bytes is None:
        vmem_bytes = (64 if two_tc else 128) * 1024 * 1024
    if vmem_bytes >= 96 * 1024 * 1024:
        # v5e / v6e: 128 MiB physical VMEM per TensorCore.
        return 100 * 1024 * 1024, 60 * 1024 * 1024, two_tc
    # v7x: 64 MiB physical -> leave headroom for compiler-internal scratch.
    return 44 * 1024 * 1024, 26 * 1024 * 1024, two_tc


def _choose_row_tile(rows, d_pad, dtype, tile_budget, two_tc):
    """Largest row tile that fits the VMEM budget; megacore/tail handling."""
    sub = _sublane_multiple(dtype)
    if rows <= sub:
        return rows                          # full-extent block (always legal)
    itemsize = jnp.dtype(dtype).itemsize
    # 2x-buffered input + 2x-buffered output tiles + ~3 live fp32 temporaries.
    bytes_per_row = d_pad * (4 * itemsize + 3 * 4)
    tm = (tile_budget // bytes_per_row) // sub * sub
    tm = max(sub, min(tm, _MAX_ROW_TILE))
    if two_tc:
        # Keep >= _MIN_GRID_STEPS grid steps so both TensorCores get work
        # (round DOWN to the sublane multiple).
        cap = max(sub, (pl.cdiv(rows, _MIN_GRID_STEPS) // sub) * sub)
        tm = min(tm, cap)
    if tm >= rows:
        return rows                          # single full-extent block
    # Balance the tail: same step count, more even blocks (never grows tm).
    steps = pl.cdiv(rows, tm)
    tm = max(sub, min(tm, pl.cdiv(pl.cdiv(rows, steps), sub) * sub))
    if tm >= rows:
        return rows
    return tm


def _ln_stats(x_ref, true_d):
    # One-pass statistics: the two reductions are independent -> both XLUs run
    # concurrently; fp32 accumulation.  Pad lanes of x are zero so the sums are
    # exact; divide by the true feature size.
    x = x_ref[...].astype(jnp.float32)
    inv_d = jnp.float32(1.0 / true_d)
    s1 = jnp.sum(x, axis=-1, keepdims=True)
    s2 = jnp.sum(x * x, axis=-1, keepdims=True)
    mean = s1 * inv_d
    var = jnp.maximum(s2 * inv_d - mean * mean, 0.0)   # clamp tiny negative
    return mean, jax.lax.rsqrt(var + EPS)


def _ln_kernel_bias(x_ref, w_ref, b_ref, o_ref, *, true_d):
    mean, inv_std = _ln_stats(x_ref, true_d)
    # Re-read x (cast on the fly): avoids holding the fp32 upcast of the whole
    # tile live across both phases; VMEM loads are cheap (3 vld/cycle).
    x = x_ref[...].astype(jnp.float32)
    y = (x - mean) * inv_std
    y = y * w_ref[...].astype(jnp.float32) + b_ref[...].astype(jnp.float32)
    o_ref[...] = y.astype(o_ref.dtype)


def _ln_kernel_nobias(x_ref, w_ref, o_ref, *, true_d):
    mean, inv_std = _ln_stats(x_ref, true_d)
    x = x_ref[...].astype(jnp.float32)
    y = (x - mean) * inv_std * w_ref[...].astype(jnp.float32)
    o_ref[...] = y.astype(o_ref.dtype)


def layer_norm(x, weight, bias=None):
    """LayerNorm over the last dim of x with optional bias (eps=1e-5)."""
    orig_shape = x.shape
    D = orig_shape[-1]
    assert weight.shape == (D,)
    if bias is not None:
        assert bias.shape == (D,)

    vmem_limit, tile_budget, two_tc = _tpu_config()

    x2 = x.reshape(-1, D)
    rows = x2.shape[0]

    # Pad the feature dim to a multiple of 128 so stores are lane-dense
    # (unmasked vst).  Zero-padded x keeps s1/s2 exact; pad columns are sliced
    # off after the kernel.
    d_pad = pl.cdiv(D, _LANE) * _LANE
    pad = d_pad - D
    if pad:
        x2 = jnp.pad(x2, ((0, 0), (0, pad)))
        w2 = jnp.pad(weight, (0, pad)).reshape(1, d_pad)
        b2 = jnp.pad(bias, (0, pad)).reshape(1, d_pad) if bias is not None else None
    else:
        w2 = weight.reshape(1, d_pad)
        b2 = bias.reshape(1, d_pad) if bias is not None else None

    tm = _choose_row_tile(rows, d_pad, x2.dtype, tile_budget, two_tc)
    grid = (pl.cdiv(rows, tm),)              # partial last block clipped on write

    # TODO(synk): sweep pipeline_mode=pl.Buffered(3) on x_spec for v7x (short
    # per-step DMA at 3.2 TB/s) instead of assuming the default depth of 2.
    x_spec = pl.BlockSpec((tm, d_pad), lambda i: (i, 0))
    p_spec = pl.BlockSpec((1, d_pad), lambda i: (0, 0))
    o_spec = pl.BlockSpec((tm, d_pad), lambda i: (i, 0))

    itemsize = jnp.dtype(x2.dtype).itemsize
    cost = pl.CostEstimate(
        flops=7 * rows * D,
        transcendentals=rows,
        bytes_accessed=2 * rows * d_pad * itemsize + 2 * d_pad * 4,
    )
    compiler_params = pltpu.CompilerParams(
        dimension_semantics=("parallel",),
        vmem_limit_bytes=vmem_limit,
    )
    out_shape = jax.ShapeDtypeStruct((rows, d_pad), x.dtype)

    if bias is None:
        kernel = functools.partial(_ln_kernel_nobias, true_d=float(D))
        in_specs = [x_spec, p_spec]
        args = (x2, w2)
    else:
        kernel = functools.partial(_ln_kernel_bias, true_d=float(D))
        in_specs = [x_spec, p_spec, p_spec]
        args = (x2, w2, b2)

    out = pl.pallas_call(
        kernel,
        out_shape=out_shape,
        grid_spec=pltpu.PrefetchScalarGridSpec(
            num_scalar_prefetch=0,
            grid=grid,
            in_specs=in_specs,
            out_specs=o_spec,
        ),
        compiler_params=compiler_params,
        cost_estimate=cost,
    )(*args)

    if pad:
        out = out[:, :D]
    return out.reshape(orig_shape)


if __name__ == "__main__":
    key = jax.random.PRNGKey(0)
    batch, seq, hidden = 2, 8, 32

    # nn.Parameter(torch.ones(ndim)) / torch.zeros(ndim)
    weight = jnp.ones((hidden,), dtype=jnp.float32)
    bias = jnp.zeros((hidden,), dtype=jnp.float32)

    x = jax.random.normal(key, (batch, seq, hidden), dtype=jnp.float32)

    # Reference in plain JAX (matches F.layer_norm: biased var, eps inside sqrt).
    mean = jnp.mean(x, axis=-1, keepdims=True)
    var = jnp.mean((x - mean) ** 2, axis=-1, keepdims=True)
    xhat = (x - mean) / jnp.sqrt(var + EPS)

    # bias=True path
    y = layer_norm(x, weight, bias)
    jax.block_until_ready(y)
    ref = xhat * weight + bias
    assert jnp.allclose(y, ref, atol=1e-5, rtol=1e-5)

    # bias=False path (LayerNorm(ndim, bias=False))
    y_nb = layer_norm(x, weight, None)
    jax.block_until_ready(y_nb)
    ref_nb = xhat * weight
    assert jnp.allclose(y_nb, ref_nb, atol=1e-5, rtol=1e-5)

    print("KERNEL_OK")
</pallas_src>

<mosaic_0001>
module attributes {stable_mosaic.version = 11 : i64} {
  func.func @_ln_kernel_bias(%arg0: i32, %arg1: memref<16x128xf32, #tpu.memory_space<vmem>>, %arg2: memref<1x128xf32, #tpu.memory_space<vmem>>, %arg3: memref<1x128xf32, #tpu.memory_space<vmem>>, %arg4: memref<16x128xf32, #tpu.memory_space<vmem>>) attributes {dimension_semantics = [#tpu.dimension_semantics<parallel>], iteration_bounds = array<i64: 1>, scalar_prefetch = 0 : i64, scratch_operands = 0 : i64, tpu.core_type = #tpu.core_type<tc>, window_params = [{transform_indices = @transform_0, window_bounds = array<i64: 16, 128>}, {pipeline_mode = #tpu.pipeline_mode<synchronous>, transform_indices = @transform_1, window_bounds = array<i64: 1, 128>}, {pipeline_mode = #tpu.pipeline_mode<synchronous>, transform_indices = @transform_2, window_bounds = array<i64: 1, 128>}, {transform_indices = @transform_3, window_bounds = array<i64: 16, 128>}]} {
    %c0 = arith.constant 0 : index
    %c0_0 = arith.constant 0 : index
    %0 = vector.load %arg1[%c0, %c0_0] : memref<16x128xf32, #tpu.memory_space<vmem>>, vector<16x128xf32>
    %cst = arith.constant dense<0.000000e+00> : vector<16xf32>
    %1 = vector.multi_reduction <add>, %0, %cst [1] : vector<16x128xf32> to vector<16xf32>
    %2 = vector.shape_cast %1 : vector<16xf32> to vector<16x1xf32>
    %3 = arith.mulf %0, %0 : vector<16x128xf32>
    %cst_1 = arith.constant dense<0.000000e+00> : vector<16xf32>
    %4 = vector.multi_reduction <add>, %3, %cst_1 [1] : vector<16x128xf32> to vector<16xf32>
    %5 = vector.shape_cast %4 : vector<16xf32> to vector<16x1xf32>
    %cst_2 = arith.constant 3.125000e-02 : f32
    %6 = vector.broadcast %cst_2 : f32 to vector<16x1xf32>
    %7 = arith.mulf %2, %6 : vector<16x1xf32>
    %cst_3 = arith.constant 3.125000e-02 : f32
    %8 = vector.broadcast %cst_3 : f32 to vector<16x1xf32>
    %9 = arith.mulf %5, %8 : vector<16x1xf32>
    %10 = arith.mulf %7, %7 : vector<16x1xf32>
    %11 = arith.subf %9, %10 : vector<16x1xf32>
    %cst_4 = arith.constant 0.000000e+00 : f32
    %12 = vector.broadcast %cst_4 : f32 to vector<16x1xf32>
    %13 = arith.maximumf %11, %12 : vector<16x1xf32>
    %cst_5 = arith.constant 9.99999974E-6 : f32
    %14 = vector.broadcast %cst_5 : f32 to vector<16x1xf32>
    %15 = arith.addf %13, %14 : vector<16x1xf32>
    %16 = math.rsqrt %15 : vector<16x1xf32>
    %c0_6 = arith.constant 0 : index
    %c0_7 = arith.constant 0 : index
    %17 = vector.load %arg1[%c0_6, %c0_7] : memref<16x128xf32, #tpu.memory_space<vmem>>, vector<16x128xf32>
    %18 = vector.broadcast %7 : vector<16x1xf32> to vector<16x128xf32>
    %19 = arith.subf %17, %18 : vector<16x128xf32>
    %20 = vector.broadcast %16 : vector<16x1xf32> to vector<16x128xf32>
    %21 = arith.mulf %19, %20 : vector<16x128xf32>
    %c0_8 = arith.constant 0 : index
    %c0_9 = arith.constant 0 : index
    %22 = vector.load %arg2[%c0_8, %c0_9] : memref<1x128xf32, #tpu.memory_space<vmem>>, vector<1x128xf32>
    %23 = vector.broadcast %22 : vector<1x128xf32> to vector<16x128xf32>
    %24 = arith.mulf %21, %23 : vector<16x128xf32>
    %c0_10 = arith.constant 0 : index
    %c0_11 = arith.constant 0 : index
    %25 = vector.load %arg3[%c0_10, %c0_11] : memref<1x128xf32, #tpu.memory_space<vmem>>, vector<1x128xf32>
    %26 = vector.broadcast %25 : vector<1x128xf32> to vector<16x128xf32>
    %27 = arith.addf %24, %26 : vector<16x128xf32>
    %c0_12 = arith.constant 0 : index
    %c0_13 = arith.constant 0 : index
    %28 = vector.load %arg4[%c0_12, %c0_13] : memref<16x128xf32, #tpu.memory_space<vmem>>, vector<16x128xf32>
    tpu.vector_store %arg4[%c0_12, %c0_13], %27 {strides = array<i32>} : memref<16x128xf32, #tpu.memory_space<vmem>>, vector<16x128xf32>,
    return
  }
  func.func @transform_0(%arg0: i32) -> (i32, i32) {
    %c0_i32 = arith.constant 0 : i32
    %c0_i32_0 = arith.constant 0 : i32
    return %arg0, %c0_i32 : i32, i32
  }
  func.func @transform_1(%arg0: i32) -> (i32, i32) {
    %c0_i32 = arith.constant 0 : i32
    %c0_i32_0 = arith.constant 0 : i32
    %c0_i32_1 = arith.constant 0 : i32
    return %c0_i32, %c0_i32_0 : i32, i32
  }
  func.func @transform_2(%arg0: i32) -> (i32, i32) {
    %c0_i32 = arith.constant 0 : i32
    %c0_i32_0 = arith.constant 0 : i32
    %c0_i32_1 = arith.constant 0 : i32
    return %c0_i32, %c0_i32_0 : i32, i32
  }
  func.func @transform_3(%arg0: i32) -> (i32, i32) {
    %c0_i32 = arith.constant 0 : i32
    %c0_i32_0 = arith.constant 0 : i32
    return %arg0, %c0_i32 : i32, i32
  }
}

</mosaic_0001>

<llo_original>
// kernel: tpu_custom_call.1
$region0: #{tpu_custom_call.1}
  #allocation0 [shape = 'u32[]', space=smem, size = 0x4, offset = 0x4, fixed_abs, tag = 'smem constant byte address 0x4 - core index']
  #allocation1 [shape = 'u32[144,128]{1,0:T(1,128)}', space=vmem, size = 0x12000, scoped, tag = 'internal scratch']
  %s0 = inlined_call_operand.hbm [shape: f32[16,128], index: 0, kind: input, shape index: {}]
  %s1 = inlined_call_operand.hbm [shape: f32[1,128], index: 1, kind: input, shape index: {}]
  %s2 = inlined_call_operand.hbm [shape: f32[1,128], index: 2, kind: input, shape index: {}]
  %s3 = inlined_call_operand.hbm [shape: f32[16,128], index: 3, kind: output, shape index: {}]
  %s4 = sld [smem:[#allocation0]]
  $region34: #{tpu_custom_call.1} parent=0
    _
  %s6 = ssub.s32 1, %s4
  %s7 = scalar_select 0, %s6, %s4
  $region1: #{tpu_custom_call.1} parent=0
    #allocation2 [shape = 'u8[8192]{0}', space=vmem, size = 0x2000, scoped, tag = 'input window, operand 0, single buffered']
    #allocation3 [shape = 's32[1]{0}', space=sflag, size = 0x4, scoped, tag = 'scoped memory for tpu_custom_call.1']
    #allocation4 [shape = 's32[1]{0}', space=sflag, size = 0x4, scoped, tag = 'scoped memory for tpu_custom_call.1']
    #allocation5 [shape = 'u8[512]{0}', space=vmem, size = 0x400, scoped, tag = 'input window, operand 1, single buffered']
    #allocation6 [shape = 's32[1]{0}', space=sflag, size = 0x4, scoped, tag = 'scoped memory for tpu_custom_call.1']
    #allocation7 [shape = 'u8[512]{0}', space=vmem, size = 0x400, scoped, tag = 'input window, operand 2, single buffered']
    #allocation8 [shape = 'u8[8192]{0}', space=vmem, size = 0x2000, scoped, tag = 'output window, operand 0, single buffered']
    %8 = vsyncpa [#allocation3], 0
    %9 = vsyncpa [#allocation6], 0
    %10 = vsyncpa [#allocation4], 0
    // Predicated region
    $region2: #{tpu_custom_call.1} parent=1 // pred_check
      _
    $region3: #{tpu_custom_call.1} parent=1 // pred_check_branch
      %12 = sbr.rel (0) target = $region5
    $region4: #{tpu_custom_call.1} parent=1 // pred_region
      %s14 = ssub.s32 256, 256
      %15 = vsyncadd [#allocation3], %s14
      %s16 = sshll.u32 [#allocation2], 4
      %s17 = int_to_ptr.vmem [resolvable:$true] %s16
      %22 = dma.hbm_to_vmem [thread:$0]  %s0, 256, %s17, [#allocation3], 128, 128, 8
    $region5: #{tpu_custom_call.1} parent=1 // pred_fallthru
      _
    // Predicated region
    $region6: #{tpu_custom_call.1} parent=1 // pred_check
      _
    $region7: #{tpu_custom_call.1} parent=1 // pred_check_branch
      %24 = sbr.rel (0) target = $region9
    $region8: #{tpu_custom_call.1} parent=1 // pred_region
      %s26 = ssub.s32 16, 16
      %27 = vsyncadd [#allocation6], %s26
      %s29 = sshll.u32 [#allocation5], 4
      %s30 = int_to_ptr.vmem [resolvable:$true] %s29
      %32 = dma.hbm_to_vmem [thread:$0]  %s1, 16, %s30, [#allocation6]
    $region9: #{tpu_custom_call.1} parent=1 // pred_fallthru
      _
    // Predicated region
    $region10: #{tpu_custom_call.1} parent=1 // pred_check
      _
    $region11: #{tpu_custom_call.1} parent=1 // pred_check_branch
      %34 = sbr.rel (0) target = $region13
    $region12: #{tpu_custom_call.1} parent=1 // pred_region
      %s36 = ssub.s32 16, 16
      %37 = vsyncadd [#allocation6], %s36
      %s39 = sshll.u32 [#allocation7], 4
      %s40 = int_to_ptr.vmem [resolvable:$true] %s39
      %42 = dma.hbm_to_vmem [thread:$0]  %s2, 16, %s40, [#allocation6]
    $region13: #{tpu_custom_call.1} parent=1 // pred_fallthru
      _
    // Predicated region
    $region14: #{tpu_custom_call.1} parent=1 // pred_check
      _
    $region15: #{tpu_custom_call.1} parent=1 // pred_check_branch
      %44 = sbr.rel (0) target = $region17
    $region16: #{tpu_custom_call.1} parent=1 // pred_region
      %45 = dma.done [#allocation3], 256
    $region17: #{tpu_custom_call.1} parent=1 // pred_fallthru
      _
    // Predicated region
    $region18: #{tpu_custom_call.1} parent=1 // pred_check
      _
    $region19: #{tpu_custom_call.1} parent=1 // pred_check_branch
      %47 = sbr.rel (0) target = $region21
    $region20: #{tpu_custom_call.1} parent=1 // pred_region
      %48 = dma.done [#allocation6], 16
    $region21: #{tpu_custom_call.1} parent=1 // pred_fallthru
      _
    // Predicated region
    $region22: #{tpu_custom_call.1} parent=1 // pred_check
      _
    $region23: #{tpu_custom_call.1} parent=1 // pred_check_branch
      %50 = sbr.rel (0) target = $region25
    $region24: #{tpu_custom_call.1} parent=1 // pred_region
      %51 = dma.done [#allocation6], 16
    $region25: #{tpu_custom_call.1} parent=1 // pred_fallthru
      _
    %v52 = vld [vmem:[#allocation2] sm:$0xff]
    %v53 = vld [vmem:[#allocation2 + $0x8] sm:$0xff]
    %54 = vadd.xlane.f32.xlu0 %v52
    %v55 = vpop.xlane.xlu0 %54
    %56 = vadd.xlane.f32.xlu0 %v53
    %v57 = vpop.xlane.xlu0 %56
    %v58 = vmul.f32 %v52, %v52
    %v59 = vmul.f32 %v53, %v53
    %60 = vadd.xlane.f32.xlu0 %v58
    %v61 = vpop.xlane.xlu0 %60
    %62 = vadd.xlane.f32.xlu0 %v59
    %v63 = vpop.xlane.xlu0 %62
    %v64 = vmul.f32 %v55, 0.03125
    %v65 = vmul.f32 %v57, 0.03125
    %v66 = vmul.f32 %v61, 0.03125
    %v67 = vmul.f32 %v63, 0.03125
    %v68 = vmul.f32 %v64, %v64
    %v69 = vmul.f32 %v65, %v65
    %v70 = vsub.f32 %v66, %v68
    %v71 = vsub.f32 %v67, %v69
    %v72 = vmax.f32 %v70, 0.0
    %v73 = vmax.f32 %v71, 0.0
    %v74 = vadd.f32 %v72, 1e-05
    %v75 = vadd.f32 %v73, 1e-05
    %v76 = vrsqrt.pop %v74
    %v77 = vrsqrt.pop %v75
    %v78 = vsub.f32 %v52, %v64
    %v79 = vsub.f32 %v53, %v65
    %v80 = vmul.f32 %v78, %v76
    %v81 = vmul.f32 %v79, %v77
    %v82 = vld [vmem:[#allocation5] sm:$0x1]
    %v84 = vlaneseq
    %v85 = vshrl.u32 %v84, 7
    %v86 = vsub.s32 0, %v85
    %v87 = vrot.slane %v82, %v86
    %v89 = vmul.f32 %v80, %v87
    %v90 = vmul.f32 %v81, %v87
    %v91 = vld [vmem:[#allocation7] sm:$0x1]
    %v93 = vlaneseq
    %v94 = vshrl.u32 %v93, 7
    %v95 = vsub.s32 0, %v94
    %v96 = vrot.slane %v91, %v95
    %v98 = vadd.f32 %v89, %v96
    %v99 = vadd.f32 %v90, %v96
    %100 = vst [vmem:[#allocation8] sm:$0xff] %v98
    %101 = vst [vmem:[#allocation8 + $0x8] sm:$0xff] %v99
    // Predicated region
    $region26: #{tpu_custom_call.1} parent=1 // pred_check
      _
    $region27: #{tpu_custom_call.1} parent=1 // pred_check_branch
      %103 = sbr.rel (0) target = $region29
    $region28: #{tpu_custom_call.1} parent=1 // pred_region
      %s105 = ssub.s32 256, 256
      %106 = vsyncadd [#allocation4], %s105
      %s107 = sshll.u32 [#allocation8], 4
      %s108 = int_to_ptr.vmem [resolvable:$true] %s107
      %113 = dma.vmem_to_hbm [thread:$0]  %s108, 256, %s3, [#allocation4], 128, 128, 8
    $region29: #{tpu_custom_call.1} parent=1 // pred_fallthru
      _
    // Predicated region
    $region30: #{tpu_custom_call.1} parent=1 // pred_check
      _
    $region31: #{tpu_custom_call.1} parent=1 // pred_check_branch
      %115 = sbr.rel (0) target = $region33
    $region32: #{tpu_custom_call.1} parent=1 // pred_region
      %116 = dma.done [#allocation4], 256
    $region33: #{tpu_custom_call.1} parent=1 // pred_fallthru
      _
    %117 = vsyncpa [#allocation3], 1
    %118 = vsyncpa [#allocation6], 1
    %119 = vsyncpa [#allocation4], 1

</llo_original>
